<compile_context>
chip_gen: v7x
topology: tpu7x:2x2x1
jax: 0.10.0
libtpu: 0.0.40
codegen_flags: <defaults>
</compile_context>

<pallas_src>
import jax
import jax.numpy as jnp
from jax.experimental import pallas as pl
from jax.experimental.pallas import tpu as pltpu

_CHUNK_THRESHOLD_BYTES = 4 * 1024 * 1024  # only chunk multi-MiB tensors
_MAX_CHUNKS = 4                           # enough to reach HBM roofline on v6e/v7x


def _make_identity_copy_kernel(num_chunks, chunk_rows):
    """Build an HBM->HBM copy kernel issuing `num_chunks` concurrent DMAs."""

    def kernel(x_hbm_ref, o_hbm_ref, copy_sems):
        if num_chunks == 1:
            # Single whole-tensor DMA: cheapest form for small/medium tensors.
            cp = pltpu.make_async_copy(x_hbm_ref, o_hbm_ref, copy_sems.at[0])
            cp.start()
            cp.wait()
            return
        # Chunked path: start all DMAs (one semaphore each), then wait all,
        # so the copies are in flight concurrently.
        copies = []
        for c in range(num_chunks):
            rows = pl.ds(c * chunk_rows, chunk_rows)  # static, aligned slices
            cp = pltpu.make_async_copy(
                x_hbm_ref.at[rows], o_hbm_ref.at[rows], copy_sems.at[c]
            )
            cp.start()
            copies.append(cp)
        for cp in copies:
            cp.wait()

    return kernel


def identity(x):
    """Identity forward (the module's actual semantics): zero-cost, no kernel."""
    return x


def identity_copy(x):
    """Materialized identity: bit-exact copy of x via HBM->HBM DMA in Pallas."""
    nbytes = int(x.size) * x.dtype.itemsize

    # Decide chunking: only for large tensors, only along a cleanly divisible
    # leading dim so every descriptor stays a contiguous strided copy.
    num_chunks = 1
    chunk_rows = 1
    if x.ndim >= 1:
        leading = x.shape[0]
        chunk_rows = leading
        if nbytes >= _CHUNK_THRESHOLD_BYTES:
            for cand in range(min(_MAX_CHUNKS, leading), 1, -1):
                if leading % cand == 0:
                    num_chunks = cand
                    chunk_rows = leading // cand
                    break

    kernel = _make_identity_copy_kernel(num_chunks, chunk_rows)

    return pl.pallas_call(
        kernel,
        out_shape=jax.ShapeDtypeStruct(x.shape, x.dtype),
        in_specs=[pl.BlockSpec(memory_space=pl.ANY)],   # stay in HBM, no auto-DMA
        out_specs=pl.BlockSpec(memory_space=pl.ANY),    # stay in HBM, no auto-DMA
        scratch_shapes=[pltpu.SemaphoreType.DMA((num_chunks,))],  # instantiated spec
        cost_estimate=pl.CostEstimate(
            flops=0, transcendentals=0, bytes_accessed=2 * nbytes
        ),
    )(x)


if __name__ == "__main__":
    key = jax.random.PRNGKey(0)
    x = jax.random.normal(key, (2, 4, 16, 16), dtype=jnp.float32)  # NCHW

    # True Identity semantics: no copy, no kernel, zero HBM traffic.
    y = identity(x)

    # Materialized-copy path: exercise the Pallas DMA kernel once.
    y_copy = identity_copy(x)
    jax.block_until_ready((y, y_copy))

    assert y.shape == x.shape and y.dtype == x.dtype
    assert y_copy.shape == x.shape and y_copy.dtype == x.dtype
    assert bool(jnp.all(y == x))
    assert bool(jnp.all(y_copy == x))
    print("KERNEL_OK")
</pallas_src>

<mosaic_0001>
module attributes {stable_mosaic.version = 11 : i64} {
  func.func @kernel(%arg0: memref<2x4x16x16xf32, #tpu.memory_space<any>>, %arg1: memref<2x4x16x16xf32, #tpu.memory_space<any>>, %arg2: memref<1x!tpu.dma_semaphore, #tpu.memory_space<semaphore_mem>>) attributes {dimension_semantics = [], scalar_prefetch = 0 : i64, scratch_operands = 1 : i64, tpu.core_type = #tpu.core_type<tc>} {
    %c0_i32 = arith.constant 0 : i32
    %0 = tpu.memref_slice %arg2[%c0_i32] : memref<1x!tpu.dma_semaphore, #tpu.memory_space<semaphore_mem>> -> memref<1x!tpu.dma_semaphore, #tpu.memory_space<semaphore_mem>>
    %1 = tpu.memref_squeeze %0 : memref<1x!tpu.dma_semaphore, #tpu.memory_space<semaphore_mem>> -> memref<!tpu.dma_semaphore, #tpu.memory_space<semaphore_mem>>
    tpu.enqueue_dma source(%arg0 : memref<2x4x16x16xf32, #tpu.memory_space<any>>) target(%arg1 : memref<2x4x16x16xf32, #tpu.memory_space<any>>) target_semaphore(%1 : memref<!tpu.dma_semaphore, #tpu.memory_space<semaphore_mem>>)
    %c0_i32_0 = arith.constant 0 : i32
    %2 = tpu.memref_slice %arg2[%c0_i32_0] : memref<1x!tpu.dma_semaphore, #tpu.memory_space<semaphore_mem>> -> memref<1x!tpu.dma_semaphore, #tpu.memory_space<semaphore_mem>>
    %3 = tpu.memref_squeeze %2 : memref<1x!tpu.dma_semaphore, #tpu.memory_space<semaphore_mem>> -> memref<!tpu.dma_semaphore, #tpu.memory_space<semaphore_mem>>
    tpu.wait_dma2 semaphore(%3 : memref<!tpu.dma_semaphore, #tpu.memory_space<semaphore_mem>>) src(%arg0 : memref<2x4x16x16xf32, #tpu.memory_space<any>>) dst(%arg1 : memref<2x4x16x16xf32, #tpu.memory_space<any>>)
    return
  }
}

</mosaic_0001>

<llo_original>
// kernel: tpu_custom_call.1
$region0: #{tpu_custom_call.1}
  #allocation0 [shape = 'u32[]', space=smem, size = 0x4, offset = 0x4, fixed_abs, tag = 'smem constant byte address 0x4 - core index']
  #allocation1 [shape = 'u32[144,128]{1,0:T(1,128)}', space=vmem, size = 0x12000, scoped, tag = 'internal scratch']
  #allocation2 [shape = 's32[1]{0}', space=sflag, size = 0x4, scoped, tag = 'scratch operand']
  #allocation3 [shape = 's32[]', space=sflag, size = 0x4, offset = 0, fixed_abs, tag = 'sflag constant byte address 0x0 - dummy sync flag']
  #allocation4 [shape = 'u32[0]{0}', space=smem, size = 0, offset = 0, fixed_abs, tag = 'smem constant byte address 0x0 - null']
  %s0 = inlined_call_operand.hbm [shape: f32[2,4,16,16], index: 0, kind: input, shape index: {}]
  %s1 = inlined_call_operand.hbm [shape: f32[2,4,16,16], index: 1, kind: output, shape index: {}]
  %s2 = sld [smem:[#allocation0]]
  $region2: #{tpu_custom_call.1} parent=0
    _
  %s4 = ssub.s32 1, %s2
  %s5 = scalar_select 0, %s4, %s2
  %s7 = sshll.u32 1, 14
  %s8 = sxor.u32 4294967295, %s7
  %s11 = sshll.u32 3, 24
  %s12 = sxor.u32 4294967295, %s11
  %s13 = sand.u32 0, %s12
  %s15 = sor.u32 %s13, 0
  %18 = dma.general %s0, 2048, %s1, [#allocation2], [#allocation3], [#allocation4], %s15, 0
  %s19 = smul.u32 2, 4
  %s20 = smul.u32 %s19, 16
  %s21 = smul.u32 %s20, 1
  %s22 = sshll.u32 %s21, 4
  %23 = dma.done [#allocation2], %s22
  %24 = vsyncmov [#allocation2]
  %s25 = vpop.sfrf %24
  %p26 = scmp.eq.s32.totalorder %s25, 0
  %p27 = pneg %p26
  %29 = shalt.err (%p27)

</llo_original>
